<compile_context>
chip_gen: v6e
topology: v6e:2x2x1
jax: 0.10.0
libtpu: 0.0.40
codegen_flags: <defaults>
</compile_context>

<pallas_src>
import jax
import jax.numpy as jnp
from jax.experimental import pallas as pl
from jax.experimental.pallas import tpu as pltpu

BN_EPS = 1e-5
LANE = 128      # TPU lane width: hidden feature dims are padded to this
SUBLANE = 8     # sublane granularity for the batch axis


def _ceil_to(x, m):
    return (x + m - 1) // m * m


# ---------------------------------------------------------------------------
# Kernel
# ---------------------------------------------------------------------------
def mlp_kernel(x_ref, w0_ref, w1_ref, w2_ref, w3_ref, b012_ref, b3_ref, o_ref):
    """Fused 4-layer MLP.

    x_ref:   (block_b, n_in)  f32   (lane-narrow input, no 128 padding)
    w0_ref:  (n_in, 128)      bf16
    w1_ref:  (128, 128)       bf16
    w2_ref:  (128, 128)       bf16  (eval BatchNorm folded in)
    w3_ref:  (128, n_out)     bf16  (lane-narrow output)
    b012_ref:(3, 128)         f32   rows: b0, b1, b2 (BN folded in)
    b3_ref:  (1, n_out)       f32
    o_ref:   (block_b, n_out) f32
    """
    wdt = w0_ref.dtype                      # MXU input dtype (bf16)
    b = b012_ref[...]

    x = x_ref[...].astype(wdt)
    # linear
    h = jnp.dot(x, w0_ref[...], preferred_element_type=jnp.float32) + b[0:1, :]
    # h1 + ReLU
    h = jnp.dot(h.astype(wdt), w1_ref[...],
                preferred_element_type=jnp.float32) + b[1:2, :]
    h = jnp.maximum(h, 0.0)
    # BatchNorm1d (eval, running stats) is folded into w2/b2 on the host.
    # h2 + ReLU
    h = jnp.dot(h.astype(wdt), w2_ref[...],
                preferred_element_type=jnp.float32) + b[2:3, :]
    h = jnp.maximum(h, 0.0)
    # Dropout(p=0.1): identity in eval mode.
    # h3 + Sigmoid (computed only on the n_out valid lanes)
    h = jnp.dot(h.astype(wdt), w3_ref[...],
                preferred_element_type=jnp.float32) + b3_ref[...]
    o_ref[...] = jax.nn.sigmoid(h).astype(o_ref.dtype)


# ---------------------------------------------------------------------------
# Host-side parameter prep: fold BN, pack biases, pad hidden dims to 128 lanes
# ---------------------------------------------------------------------------
def pack_params(p, *, mxu_dtype=jnp.bfloat16):
    n_in, d_model = p["w0"].shape
    n_hidden = p["w2"].shape[0]
    n_out = p["w3"].shape[1]
    assert max(d_model, n_hidden, n_out) <= LANE, \
        "pack_params assumes every hidden/output feature dim <= 128"

    # Fold eval-mode BatchNorm (running stats + affine) into the h2 linear:
    #   y = h*s + (beta - mean*s);  y @ w2 + b2 = h @ (s[:,None]*w2) + ((beta-mean*s)@w2 + b2)
    s = p["gamma"] * jax.lax.rsqrt(p["var"] + BN_EPS)            # (n_hidden,)
    w2_f = p["w2"] * s[:, None]
    b2_f = (p["beta"] - p["mean"] * s) @ p["w2"] + p["b2"]

    def pad_cols(w):
        return jnp.pad(w, ((0, 0), (0, LANE - w.shape[1])))

    def pad_rows(w):
        return jnp.pad(w, ((0, LANE - w.shape[0]), (0, 0)))

    def padb(b):
        return jnp.pad(b, (0, LANE - b.shape[0]))

    w0 = pad_cols(p["w0"])                  # (n_in, 128)   zero pad -> no effect
    w1 = pad_rows(pad_cols(p["w1"]))        # (128, 128)
    w2 = pad_rows(pad_cols(w2_f))           # (128, 128)
    w3 = pad_rows(p["w3"])                  # (128, n_out)  output stays narrow

    return {
        "w0": w0.astype(mxu_dtype),
        "w1": w1.astype(mxu_dtype),
        "w2": w2.astype(mxu_dtype),
        "w3": w3.astype(mxu_dtype),
        "bias012": jnp.stack(
            [padb(p["b0"]), padb(p["b1"]), padb(b2_f)]).astype(jnp.float32),
        "bias3": p["b3"].reshape(1, n_out).astype(jnp.float32),
        "n_in": n_in,
        "n_out": n_out,
    }


# ---------------------------------------------------------------------------
# Forward wrapper
# ---------------------------------------------------------------------------
def mlp_forward(x, packed, *, block_b=4096, gridless_max_b=256):
    B, n_in = x.shape
    assert n_in == packed["n_in"]
    n_out = packed["n_out"]
    operands = (packed["w0"], packed["w1"], packed["w2"], packed["w3"],
                packed["bias012"], packed["bias3"])
    vmem = pl.BlockSpec(memory_space=pltpu.MemorySpace.VMEM)

    if B <= gridless_max_b:
        # Small batch: single grid-less call, every operand pinned whole in VMEM.
        Bp = _ceil_to(max(B, SUBLANE), SUBLANE)
        xp = x if Bp == B else jnp.pad(x, ((0, Bp - B), (0, 0)))
        out = pl.pallas_call(
            mlp_kernel,
            out_shape=jax.ShapeDtypeStruct((Bp, n_out), jnp.float32),
            in_specs=[vmem] * 7,
            out_specs=vmem,
        )(xp, *operands)
    else:
        # Tiled batch axis. At least 2 blocks so both TensorCores (v7x) get work.
        block_b = min(block_b, _ceil_to(pl.cdiv(B, 2), SUBLANE))
        # Keep batch-padding waste under ~12.5% of real work.
        while block_b > 512 and (_ceil_to(B, block_b) - B) * 8 > B:
            block_b //= 2
        Bp = _ceil_to(B, block_b)
        xp = x if Bp == B else jnp.pad(x, ((0, Bp - B), (0, 0)))
        out = pl.pallas_call(
            mlp_kernel,
            out_shape=jax.ShapeDtypeStruct((Bp, n_out), jnp.float32),
            grid=(Bp // block_b,),
            in_specs=[pl.BlockSpec((block_b, n_in), lambda i: (i, 0))]  # x: pipelined
                     + [vmem] * 6,                                      # weights: pinned
            out_specs=pl.BlockSpec((block_b, n_out), lambda i: (i, 0)),
            compiler_params=pltpu.CompilerParams(
                dimension_semantics=("parallel",)),
        )(xp, *operands)

    return out if Bp == B else out[:B]


# ---------------------------------------------------------------------------
# Parameter construction + pure-JAX reference (original, un-folded semantics)
# ---------------------------------------------------------------------------
def make_params(key, n_inputs, d_model, n_hidden, n_out):
    ks = jax.random.split(key, 12)

    def lin(kw, kb, fan_in, fan_out):
        bound = 1.0 / jnp.sqrt(jnp.float32(fan_in))
        w = jax.random.uniform(kw, (fan_in, fan_out), jnp.float32, -bound, bound)
        b = jax.random.uniform(kb, (fan_out,), jnp.float32, -bound, bound)
        return w, b

    w0, b0 = lin(ks[0], ks[1], n_inputs, d_model)
    w1, b1 = lin(ks[2], ks[3], d_model, n_hidden)
    w2, b2 = lin(ks[4], ks[5], n_hidden, n_hidden)
    w3, b3 = lin(ks[6], ks[7], n_hidden, n_out)

    # Non-trivial BatchNorm running stats / affine to exercise the fold.
    gamma = jax.random.uniform(ks[8], (n_hidden,), jnp.float32, 0.5, 1.5)
    beta = 0.5 * jax.random.normal(ks[9], (n_hidden,), jnp.float32)
    mean = 0.5 * jax.random.normal(ks[10], (n_hidden,), jnp.float32)
    var = jax.random.uniform(ks[11], (n_hidden,), jnp.float32, 0.5, 1.5)

    return {
        "w0": w0, "b0": b0,
        "w1": w1, "b1": b1,
        "gamma": gamma, "beta": beta, "mean": mean, "var": var,
        "w2": w2, "b2": b2,
        "w3": w3, "b3": b3,
    }


def mlp_reference(x, p):
    h = x @ p["w0"] + p["b0"]
    h = jnp.maximum(h @ p["w1"] + p["b1"], 0.0)
    h = (h - p["mean"]) * jax.lax.rsqrt(p["var"] + BN_EPS) * p["gamma"] + p["beta"]
    h = jnp.maximum(h @ p["w2"] + p["b2"], 0.0)
    h = h @ p["w3"] + p["b3"]
    return jax.nn.sigmoid(h)


if __name__ == "__main__":
    # Small shapes consistent with the module's forward.
    B, n_inputs, d_model, n_hidden, n_out = 8, 32, 64, 32, 16

    key = jax.random.PRNGKey(0)
    kx, kp, kx2 = jax.random.split(key, 3)
    x = jax.random.normal(kx, (B, n_inputs), jnp.float32)
    params = make_params(kp, n_inputs, d_model, n_hidden, n_out)
    packed = pack_params(params)

    # Small batch -> grid-less path.
    out = jax.block_until_ready(mlp_forward(x, packed))
    ref = mlp_reference(x, params)
    assert out.shape == (B, n_out)
    # bf16 MXU inputs (f32 accumulation) -> relaxed tolerance on sigmoid outputs.
    assert jnp.allclose(out, ref, atol=2e-2, rtol=0.0), "small-batch mismatch vs reference"

    # Moderate batch -> tiled (gridded) path, exercises batch tiling + row padding.
    B2 = 600
    x2 = jax.random.normal(kx2, (B2, n_inputs), jnp.float32)
    out2 = jax.block_until_ready(mlp_forward(x2, packed))
    ref2 = mlp_reference(x2, params)
    assert out2.shape == (B2, n_out)
    assert jnp.allclose(out2, ref2, atol=2e-2, rtol=0.0), "large-batch mismatch vs reference"

    print("KERNEL_OK")
</pallas_src>

<mosaic_0001>
module attributes {stable_mosaic.version = 11 : i64} {
  func.func @mlp_kernel(%arg0: memref<8x32xf32, #tpu.memory_space<vmem>>, %arg1: memref<32x128xbf16, #tpu.memory_space<vmem>>, %arg2: memref<128x128xbf16, #tpu.memory_space<vmem>>, %arg3: memref<128x128xbf16, #tpu.memory_space<vmem>>, %arg4: memref<128x16xbf16, #tpu.memory_space<vmem>>, %arg5: memref<3x128xf32, #tpu.memory_space<vmem>>, %arg6: memref<1x16xf32, #tpu.memory_space<vmem>>, %arg7: memref<8x16xf32, #tpu.memory_space<vmem>>) attributes {dimension_semantics = [], scalar_prefetch = 0 : i64, scratch_operands = 0 : i64, tpu.core_type = #tpu.core_type<tc>} {
    %c0 = arith.constant 0 : index
    %c0_0 = arith.constant 0 : index
    %0 = vector.load %arg5[%c0, %c0_0] : memref<3x128xf32, #tpu.memory_space<vmem>>, vector<3x128xf32>
    %c0_1 = arith.constant 0 : index
    %c0_2 = arith.constant 0 : index
    %1 = vector.load %arg0[%c0_1, %c0_2] : memref<8x32xf32, #tpu.memory_space<vmem>>, vector<8x32xf32>
    %2 = arith.truncf %1 : vector<8x32xf32> to vector<8x32xbf16>
    %c0_3 = arith.constant 0 : index
    %c0_4 = arith.constant 0 : index
    %3 = vector.load %arg1[%c0_3, %c0_4] : memref<32x128xbf16, #tpu.memory_space<vmem>>, vector<32x128xbf16>
    %cst = arith.constant dense<0.000000e+00> : vector<8x128xf32>
    %4 = tpu.matmul %2, %3, %cst {dimension_numbers = #tpu.dot_dimension_numbers<[1], [0], [0], [1], [0, 0, 1, 1], [], []>} : vector<8x32xbf16>, vector<32x128xbf16>, vector<8x128xf32> -> vector<8x128xf32>
    %5 = vector.extract_strided_slice %0 {offsets = [0, 0], sizes = [1, 128], strides = [1, 1]} : vector<3x128xf32> to vector<1x128xf32>
    %6 = vector.broadcast %5 : vector<1x128xf32> to vector<8x128xf32>
    %7 = arith.addf %4, %6 : vector<8x128xf32>
    %8 = arith.truncf %7 : vector<8x128xf32> to vector<8x128xbf16>
    %c0_5 = arith.constant 0 : index
    %c0_6 = arith.constant 0 : index
    %9 = vector.load %arg2[%c0_5, %c0_6] : memref<128x128xbf16, #tpu.memory_space<vmem>>, vector<128x128xbf16>
    %cst_7 = arith.constant dense<0.000000e+00> : vector<8x128xf32>
    %10 = tpu.matmul %8, %9, %cst_7 {dimension_numbers = #tpu.dot_dimension_numbers<[1], [0], [0], [1], [0, 0, 1, 1], [], []>} : vector<8x128xbf16>, vector<128x128xbf16>, vector<8x128xf32> -> vector<8x128xf32>
    %11 = vector.extract_strided_slice %0 {offsets = [1, 0], sizes = [1, 128], strides = [1, 1]} : vector<3x128xf32> to vector<1x128xf32>
    %12 = vector.broadcast %11 : vector<1x128xf32> to vector<8x128xf32>
    %13 = arith.addf %10, %12 : vector<8x128xf32>
    %cst_8 = arith.constant 0.000000e+00 : f32
    %14 = vector.broadcast %cst_8 : f32 to vector<8x128xf32>
    %15 = arith.maximumf %13, %14 : vector<8x128xf32>
    %16 = arith.truncf %15 : vector<8x128xf32> to vector<8x128xbf16>
    %c0_9 = arith.constant 0 : index
    %c0_10 = arith.constant 0 : index
    %17 = vector.load %arg3[%c0_9, %c0_10] : memref<128x128xbf16, #tpu.memory_space<vmem>>, vector<128x128xbf16>
    %cst_11 = arith.constant dense<0.000000e+00> : vector<8x128xf32>
    %18 = tpu.matmul %16, %17, %cst_11 {dimension_numbers = #tpu.dot_dimension_numbers<[1], [0], [0], [1], [0, 0, 1, 1], [], []>} : vector<8x128xbf16>, vector<128x128xbf16>, vector<8x128xf32> -> vector<8x128xf32>
    %19 = vector.extract_strided_slice %0 {offsets = [2, 0], sizes = [1, 128], strides = [1, 1]} : vector<3x128xf32> to vector<1x128xf32>
    %20 = vector.broadcast %19 : vector<1x128xf32> to vector<8x128xf32>
    %21 = arith.addf %18, %20 : vector<8x128xf32>
    %cst_12 = arith.constant 0.000000e+00 : f32
    %22 = vector.broadcast %cst_12 : f32 to vector<8x128xf32>
    %23 = arith.maximumf %21, %22 : vector<8x128xf32>
    %24 = arith.truncf %23 : vector<8x128xf32> to vector<8x128xbf16>
    %c0_13 = arith.constant 0 : index
    %c0_14 = arith.constant 0 : index
    %25 = vector.load %arg4[%c0_13, %c0_14] : memref<128x16xbf16, #tpu.memory_space<vmem>>, vector<128x16xbf16>
    %cst_15 = arith.constant dense<0.000000e+00> : vector<8x16xf32>
    %26 = tpu.matmul %24, %25, %cst_15 {dimension_numbers = #tpu.dot_dimension_numbers<[1], [0], [0], [1], [0, 0, 1, 1], [], []>} : vector<8x128xbf16>, vector<128x16xbf16>, vector<8x16xf32> -> vector<8x16xf32>
    %c0_16 = arith.constant 0 : index
    %c0_17 = arith.constant 0 : index
    %27 = vector.load %arg6[%c0_16, %c0_17] : memref<1x16xf32, #tpu.memory_space<vmem>>, vector<1x16xf32>
    %28 = vector.broadcast %27 : vector<1x16xf32> to vector<8x16xf32>
    %29 = arith.addf %26, %28 : vector<8x16xf32>
    %30 = arith.negf %29 : vector<8x16xf32>
    %31 = math.exp %30 : vector<8x16xf32>
    %cst_18 = arith.constant 1.000000e+00 : f32
    %32 = vector.broadcast %cst_18 : f32 to vector<8x16xf32>
    %33 = arith.addf %32, %31 : vector<8x16xf32>
    %34 = arith.divf %32, %33 : vector<8x16xf32>
    %c0_19 = arith.constant 0 : index
    %c0_20 = arith.constant 0 : index
    %35 = vector.load %arg7[%c0_19, %c0_20] : memref<8x16xf32, #tpu.memory_space<vmem>>, vector<8x16xf32>
    tpu.vector_store %arg7[%c0_19, %c0_20], %34 {strides = array<i32>} : memref<8x16xf32, #tpu.memory_space<vmem>>, vector<8x16xf32>,
    return
  }
}

</mosaic_0001>

<llo_original>
// kernel: tpu_custom_call.1
$region0: #{tpu_custom_call.1}
  #allocation0 [shape = 'u32[]', space=smem, size = 0x4, offset = 0x4, fixed_abs, tag = 'smem constant byte address 0x4 - core index']
  #allocation1 [shape = 'u32[144,128]{1,0:T(1,128)}', space=vmem, size = 0x12000, scoped, tag = 'internal scratch']
  %s0 = inlined_call_operand.vmem [shape: f32[8,32], index: 0, kind: input, shape index: {}]
  %s1 = inlined_call_operand.hbm [shape: bf16[32,128], index: 1, kind: input, shape index: {}]
  %s2 = inlined_call_operand.vmem [shape: bf16[128,128], index: 2, kind: input, shape index: {}]
  %s3 = inlined_call_operand.hbm [shape: bf16[128,128], index: 3, kind: input, shape index: {}]
  %s4 = inlined_call_operand.vmem [shape: bf16[128,16], index: 4, kind: input, shape index: {}]
  %s5 = inlined_call_operand.vmem [shape: f32[3,128], index: 5, kind: input, shape index: {}]
  %s6 = inlined_call_operand.vmem [shape: f32[1,16], index: 6, kind: input, shape index: {}]
  %s7 = inlined_call_operand.hbm [shape: f32[8,16], index: 7, kind: output, shape index: {}]
  %s8 = sld [smem:[#allocation0]]
  $region46: #{tpu_custom_call.1} parent=0
    _
  %s10 = ssub.s32 1, %s8
  %s11 = scalar_select 0, %s10, %s8
  $region1: #{tpu_custom_call.1} parent=0
    #allocation2 [shape = 'u8[8192]{0}', space=vmem, size = 0x2000, scoped, tag = 'input window, operand 1, single buffered']
    #allocation3 [shape = 's32[1]{0}', space=sflag, size = 0x4, scoped, tag = 'scoped memory for tpu_custom_call.1']
    #allocation4 [shape = 's32[1]{0}', space=sflag, size = 0x4, scoped, tag = 'scoped memory for tpu_custom_call.1']
    #allocation5 [shape = 'u8[32768]{0}', space=vmem, size = 0x8000, scoped, tag = 'input window, operand 3, single buffered']
    #allocation6 [shape = 's32[1]{0}', space=sflag, size = 0x4, scoped, tag = 'scoped memory for tpu_custom_call.1']
    #allocation7 [shape = 'u8[4096]{0}', space=vmem, size = 0x1000, scoped, tag = 'output window, operand 0, single buffered']
    %12 = vsyncpa [#allocation3], 0
    %13 = vsyncpa [#allocation6], 0
    %14 = vsyncpa [#allocation4], 0
    // Predicated region
    $region2: #{tpu_custom_call.1} parent=1 // pred_check
      _
    $region3: #{tpu_custom_call.1} parent=1 // pred_check_branch
      %16 = sbr.rel (0) target = $region5
    $region4: #{tpu_custom_call.1} parent=1 // pred_region
      _
    $region5: #{tpu_custom_call.1} parent=1 // pred_fallthru
      _
    // Predicated region
    $region6: #{tpu_custom_call.1} parent=1 // pred_check
      _
    $region7: #{tpu_custom_call.1} parent=1 // pred_check_branch
      %18 = sbr.rel (0) target = $region9
    $region8: #{tpu_custom_call.1} parent=1 // pred_region
      %s20 = ssub.s32 256, 256
      %21 = vsyncadd [#allocation3], %s20
      %s22 = sshll.u32 [#allocation2], 4
      %s23 = int_to_ptr.vmem [resolvable:$true] %s22
      %28 = dma.hbm_to_vmem [thread:$0]  %s1, 256, %s23, [#allocation3], 64, 64, 4
    $region9: #{tpu_custom_call.1} parent=1 // pred_fallthru
      _
    // Predicated region
    $region10: #{tpu_custom_call.1} parent=1 // pred_check
      _
    $region11: #{tpu_custom_call.1} parent=1 // pred_check_branch
      %30 = sbr.rel (0) target = $region13
    $region12: #{tpu_custom_call.1} parent=1 // pred_region
      _
    $region13: #{tpu_custom_call.1} parent=1 // pred_fallthru
      _
    // Predicated region
    $region14: #{tpu_custom_call.1} parent=1 // pred_check
      _
    $region15: #{tpu_custom_call.1} parent=1 // pred_check_branch
      %32 = sbr.rel (0) target = $region17
    $region16: #{tpu_custom_call.1} parent=1 // pred_region
      %s34 = ssub.s32 1024, 1024
      %35 = vsyncadd [#allocation6], %s34
      %s36 = sshll.u32 [#allocation5], 4
      %s37 = int_to_ptr.vmem [resolvable:$true] %s36
      %42 = dma.hbm_to_vmem [thread:$0]  %s3, 1024, %s37, [#allocation6], 64, 64, 4
    $region17: #{tpu_custom_call.1} parent=1 // pred_fallthru
      _
    // Predicated region
    $region18: #{tpu_custom_call.1} parent=1 // pred_check
      _
    $region19: #{tpu_custom_call.1} parent=1 // pred_check_branch
      %44 = sbr.rel (0) target = $region21
    $region20: #{tpu_custom_call.1} parent=1 // pred_region
      _
    $region21: #{tpu_custom_call.1} parent=1 // pred_fallthru
      _
    // Predicated region
    $region22: #{tpu_custom_call.1} parent=1 // pred_check
      _
    $region23: #{tpu_custom_call.1} parent=1 // pred_check_branch
      %46 = sbr.rel (0) target = $region25
    $region24: #{tpu_custom_call.1} parent=1 // pred_region
      _
    $region25: #{tpu_custom_call.1} parent=1 // pred_fallthru
      _
    // Predicated region
    $region26: #{tpu_custom_call.1} parent=1 // pred_check
      _
    $region27: #{tpu_custom_call.1} parent=1 // pred_check_branch
      %48 = sbr.rel (0) target = $region29
    $region28: #{tpu_custom_call.1} parent=1 // pred_region
      _
    $region29: #{tpu_custom_call.1} parent=1 // pred_fallthru
      _
    // Predicated region
    $region30: #{tpu_custom_call.1} parent=1 // pred_check
      _
    $region31: #{tpu_custom_call.1} parent=1 // pred_check_branch
      %50 = sbr.rel (0) target = $region33
    $region32: #{tpu_custom_call.1} parent=1 // pred_region
      %51 = dma.done [#allocation3], 256
    $region33: #{tpu_custom_call.1} parent=1 // pred_fallthru
      _
    // Predicated region
    $region34: #{tpu_custom_call.1} parent=1 // pred_check
      _
    $region35: #{tpu_custom_call.1} parent=1 // pred_check_branch
      %53 = sbr.rel (0) target = $region37
    $region36: #{tpu_custom_call.1} parent=1 // pred_region
      %54 = dma.done [#allocation6], 1024
    $region37: #{tpu_custom_call.1} parent=1 // pred_fallthru
      _
    %v56 = vld [vmem:[%s5] sm:$0x7]
    %v57 = vld [vmem:[%s0] sm:$0xff]
    %v58 = vpack.c.bf16 %v57, %v57
    %v59 = vld [vmem:[#allocation2] sm:$0xf]
    %v60 = vld [vmem:[#allocation2 + $0x4] sm:$0xf]
    %v61 = vld [vmem:[#allocation2 + $0x8] sm:$0xf]
    %v62 = vld [vmem:[#allocation2 + $0xc] sm:$0xf]
    %v63 = vlaneseq
    %v64 = vshrl.u32 %v63, 7
    %v65 = vsub.s32 0, %v64
    %v66 = vrot.slane %v56, %v65
    %v71 = vunpack.c.l.b16 %v59
    %v72 = vunpack.c.l.b16 %v60
    %v73 = vunpack.c.l.b16 %v61
    %v74 = vunpack.c.l.b16 %v62
    %v75 = vpack.c.b16 %v72, %v71
    %v76 = vpack.c.b16 %v74, %v73
    %vm79 = vcmask 261120
    %v81 = vsel %vm79, %v58, 0
    %83 = vmatprep.subr.bf16.mxu0 0
    %84 = vmatpush1.bf16.msra.mxu0 0
    %85 = vmatprep.subr.bf16.mxu0 0
    %86 = vmatpush1.bf16.msra.mxu0 0
    %87 = vmatprep.subr.bf16.mxu0 0
    %88 = vmatpush1.bf16.msra.mxu0 0
    %89 = vmatprep.subr.bf16.mxu0 0
    %90 = vmatpush1.bf16.msra.mxu0 0
    %91 = vmatprep.subr.bf16.mxu0 0
    %92 = vmatpush1.bf16.msra.mxu0 0
    %93 = vmatprep.subr.bf16.mxu0 0
    %94 = vmatpush1.bf16.msra.mxu0 0
    %95 = vmatprep.subr.bf16.mxu0 0
    %96 = vmatpush1.bf16.msra.mxu0 %v76
    %97 = vmatprep.subr.bf16.mxu0 0
    %98 = vmatpush1.bf16.msra.mxu0 %v75
    %99 = vmatprep.subr.bf16.mxu0 0
    %100 = vmatpush2.bf16.msra.mxu0 0
    %101 = vmatprep.subr.bf16.mxu0 0
    %102 = vmatpush2.bf16.msra.mxu0 0
    %103 = vmatprep.subr.bf16.mxu0 0
    %104 = vmatpush2.bf16.msra.mxu0 0
    %105 = vmatprep.subr.bf16.mxu0 0
    %106 = vmatpush2.bf16.msra.mxu0 0
    %107 = vmatprep.subr.bf16.mxu0 0
    %108 = vmatpush2.bf16.msra.mxu0 0
    %109 = vmatprep.subr.bf16.mxu0 0
    %110 = vmatpush2.bf16.msra.mxu0 0
    %111 = vmatprep.subr.bf16.mxu0 0
    %112 = vmatpush2.bf16.msra.mxu0 0
    %113 = vmatprep.subr.bf16.mxu0 0
    %114 = vmatpush2.bf16.msra.mxu0 0
    %115 = vmatprep.mubr.bf16.mxu0 0
    %116 = vmatmul.mubr.bf16.gmra.mxu0 %v81
    %v117 = vpop.f32.mrf.mxu0
    %v118 = vadd.f32 %v66, %v117
    %v119 = vpop.f32.mrf.mxu0
    %v120 = vpop.f32.mrf.mxu0
    %v121 = vpop.f32.mrf.mxu0
    %122 = vdwg.mxu0
    %v123 = vpack.c.bf16 %v118, %v118
    %v124 = vld [vmem:[%s2] sm:$0xf]
    %v125 = vld [vmem:[%s2 + $0x4] sm:$0xf]
    %v126 = vld [vmem:[%s2 + $0x8] sm:$0xf]
    %v127 = vld [vmem:[%s2 + $0xc] sm:$0xf]
    %v128 = vld [vmem:[%s2 + $0x10] sm:$0xf]
    %v129 = vld [vmem:[%s2 + $0x14] sm:$0xf]
    %v130 = vld [vmem:[%s2 + $0x18] sm:$0xf]
    %v131 = vld [vmem:[%s2 + $0x1c] sm:$0xf]
    %v132 = vld [vmem:[%s2 + $0x20] sm:$0xf]
    %v133 = vld [vmem:[%s2 + $0x24] sm:$0xf]
    %v134 = vld [vmem:[%s2 + $0x28] sm:$0xf]
    %v135 = vld [vmem:[%s2 + $0x2c] sm:$0xf]
    %v136 = vld [vmem:[%s2 + $0x30] sm:$0xf]
    %v137 = vld [vmem:[%s2 + $0x34] sm:$0xf]
    %v138 = vld [vmem:[%s2 + $0x38] sm:$0xf]
    %v139 = vld [vmem:[%s2 + $0x3c] sm:$0xf]
    %v140 = vlaneseq
    %v141 = vshrl.u32 %v140, 7
    %v142 = vsub.s32 1, %v141
    %v143 = vrot.slane %v56, %v142
    %v160 = vunpack.c.l.b16 %v124
    %v161 = vunpack.c.l.b16 %v125
    %v162 = vunpack.c.l.b16 %v126
    %v163 = vunpack.c.l.b16 %v127
    %v164 = vunpack.c.l.b16 %v128
    %v165 = vunpack.c.l.b16 %v129
    %v166 = vunpack.c.l.b16 %v130
    %v167 = vunpack.c.l.b16 %v131
    %v168 = vunpack.c.l.b16 %v132
    %v169 = vunpack.c.l.b16 %v133
    %v170 = vunpack.c.l.b16 %v134
    %v171 = vunpack.c.l.b16 %v135
    %v172 = vunpack.c.l.b16 %v136
    %v173 = vunpack.c.l.b16 %v137
    %v174 = vunpack.c.l.b16 %v138
    %v175 = vunpack.c.l.b16 %v139
    %v176 = vpack.c.b16 %v161, %v160
    %v177 = vpack.c.b16 %v163, %v162
    %v178 = vpack.c.b16 %v165, %v164
    %v179 = vpack.c.b16 %v167, %v166
    %v180 = vpack.c.b16 %v169, %v168
    %v181 = vpack.c.b16 %v171, %v170
    %v182 = vpack.c.b16 %v173, %v172
    %v183 = vpack.c.b16 %v175, %v174
    %192 = vmatprep.subr.bf16.mxu0 0
    %193 = vmatpush1.bf16.msra.mxu0 %v183
    %194 = vmatprep.subr.bf16.mxu0 0
    %195 = vmatpush1.bf16.msra.mxu0 %v182
    %196 = vmatprep.subr.bf16.mxu0 0
    %197 = vmatpush1.bf16.msra.mxu0 %v181
    %198 = vmatprep.subr.bf16.mxu0 0
    %199 = vmatpush1.bf16.msra.mxu0 %v180
    %200 = vmatprep.subr.bf16.mxu0 0
    %201 = vmatpush1.bf16.msra.mxu0 %v179
    %202 = vmatprep.subr.bf16.mxu0 0
    %203 = vmatpush1.bf16.msra.mxu0 %v178
    %204 = vmatprep.subr.bf16.mxu0 0
    %205 = vmatpush1.bf16.msra.mxu0 %v177
    %206 = vmatprep.subr.bf16.mxu0 0
    %207 = vmatpush1.bf16.msra.mxu0 %v176
    %208 = vmatprep.subr.bf16.mxu0 0
    %209 = vmatpush2.bf16.msra.mxu0 0
    %210 = vmatprep.subr.bf16.mxu0 0
    %211 = vmatpush2.bf16.msra.mxu0 0
    %212 = vmatprep.subr.bf16.mxu0 0
    %213 = vmatpush2.bf16.msra.mxu0 0
    %214 = vmatprep.subr.bf16.mxu0 0
    %215 = vmatpush2.bf16.msra.mxu0 0
    %216 = vmatprep.subr.bf16.mxu0 0
    %217 = vmatpush2.bf16.msra.mxu0 0
    %218 = vmatprep.subr.bf16.mxu0 0
    %219 = vmatpush2.bf16.msra.mxu0 0
    %220 = vmatprep.subr.bf16.mxu0 0
    %221 = vmatpush2.bf16.msra.mxu0 0
    %222 = vmatprep.subr.bf16.mxu0 0
    %223 = vmatpush2.bf16.msra.mxu0 0
    %224 = vmatprep.mubr.bf16.mxu0 0
    %225 = vmatmul.mubr.bf16.gmra.mxu0 %v123
    %v226 = vpop.f32.mrf.mxu0
    %v227 = vadd.f32 %v143, %v226
    %v228 = vpop.f32.mrf.mxu0
    %v229 = vpop.f32.mrf.mxu0
    %v230 = vpop.f32.mrf.mxu0
    %231 = vdwg.mxu0
    %v232 = vmax.f32 %v227, 0.0
    %v233 = vpack.c.bf16 %v232, %v232
    %v234 = vld [vmem:[#allocation5] sm:$0xf]
    %v235 = vld [vmem:[#allocation5 + $0x4] sm:$0xf]
    %v236 = vld [vmem:[#allocation5 + $0x8] sm:$0xf]
    %v237 = vld [vmem:[#allocation5 + $0xc] sm:$0xf]
    %v238 = vld [vmem:[#allocation5 + $0x10] sm:$0xf]
    %v239 = vld [vmem:[#allocation5 + $0x14] sm:$0xf]
    %v240 = vld [vmem:[#allocation5 + $0x18] sm:$0xf]
    %v241 = vld [vmem:[#allocation5 + $0x1c] sm:$0xf]
    %v242 = vld [vmem:[#allocation5 + $0x20] sm:$0xf]
    %v243 = vld [vmem:[#allocation5 + $0x24] sm:$0xf]
    %v244 = vld [vmem:[#allocation5 + $0x28] sm:$0xf]
    %v245 = vld [vmem:[#allocation5 + $0x2c] sm:$0xf]
    %v246 = vld [vmem:[#allocation5 + $0x30] sm:$0xf]
    %v247 = vld [vmem:[#allocation5 + $0x34] sm:$0xf]
    %v248 = vld [vmem:[#allocation5 + $0x38] sm:$0xf]
    %v249 = vld [vmem:[#allocation5 + $0x3c] sm:$0xf]
    %v250 = vlaneseq
    %v251 = vshrl.u32 %v250, 7
    %v252 = vsub.s32 2, %v251
    %v253 = vrot.slane %v56, %v252
    %v270 = vunpack.c.l.b16 %v234
    %v271 = vunpack.c.l.b16 %v235
    %v272 = vunpack.c.l.b16 %v236
    %v273 = vunpack.c.l.b16 %v237
    %v274 = vunpack.c.l.b16 %v238
    %v275 = vunpack.c.l.b16 %v239
    %v276 = vunpack.c.l.b16 %v240
    %v277 = vunpack.c.l.b16 %v241
    %v278 = vunpack.c.l.b16 %v242
    %v279 = vunpack.c.l.b16 %v243
    %v280 = vunpack.c.l.b16 %v244
    %v281 = vunpack.c.l.b16 %v245
    %v282 = vunpack.c.l.b16 %v246
    %v283 = vunpack.c.l.b16 %v247
    %v284 = vunpack.c.l.b16 %v248
    %v285 = vunpack.c.l.b16 %v249
    %v286 = vpack.c.b16 %v271, %v270
    %v287 = vpack.c.b16 %v273, %v272
    %v288 = vpack.c.b16 %v275, %v274
    %v289 = vpack.c.b16 %v277, %v276
    %v290 = vpack.c.b16 %v279, %v278
    %v291 = vpack.c.b16 %v281, %v280
    %v292 = vpack.c.b16 %v283, %v282
    %v293 = vpack.c.b16 %v285, %v284
    %302 = vmatprep.subr.bf16.mxu0 0
    %303 = vmatpush1.bf16.msra.mxu0 %v293
    %304 = vmatprep.subr.bf16.mxu0 0
    %305 = vmatpush1.bf16.msra.mxu0 %v292
    %306 = vmatprep.subr.bf16.mxu0 0
    %307 = vmatpush1.bf16.msra.mxu0 %v291
    %308 = vmatprep.subr.bf16.mxu0 0
    %309 = vmatpush1.bf16.msra.mxu0 %v290
    %310 = vmatprep.subr.bf16.mxu0 0
    %311 = vmatpush1.bf16.msra.mxu0 %v289
    %312 = vmatprep.subr.bf16.mxu0 0
    %313 = vmatpush1.bf16.msra.mxu0 %v288
    %314 = vmatprep.subr.bf16.mxu0 0
    %315 = vmatpush1.bf16.msra.mxu0 %v287
    %316 = vmatprep.subr.bf16.mxu0 0
    %317 = vmatpush1.bf16.msra.mxu0 %v286
    %318 = vmatprep.subr.bf16.mxu0 0
    %319 = vmatpush2.bf16.msra.mxu0 0
    %320 = vmatprep.subr.bf16.mxu0 0
    %321 = vmatpush2.bf16.msra.mxu0 0
    %322 = vmatprep.subr.bf16.mxu0 0
    %323 = vmatpush2.bf16.msra.mxu0 0
    %324 = vmatprep.subr.bf16.mxu0 0
    %325 = vmatpush2.bf16.msra.mxu0 0
    %326 = vmatprep.subr.bf16.mxu0 0
    %327 = vmatpush2.bf16.msra.mxu0 0
    %328 = vmatprep.subr.bf16.mxu0 0
    %329 = vmatpush2.bf16.msra.mxu0 0
    %330 = vmatprep.subr.bf16.mxu0 0
    %331 = vmatpush2.bf16.msra.mxu0 0
    %332 = vmatprep.subr.bf16.mxu0 0
    %333 = vmatpush2.bf16.msra.mxu0 0
    %334 = vmatprep.mubr.bf16.mxu0 0
    %335 = vmatmul.mubr.bf16.gmra.mxu0 %v233
    %v336 = vpop.f32.mrf.mxu0
    %v337 = vadd.f32 %v253, %v336
    %v338 = vpop.f32.mrf.mxu0
    %v339 = vpop.f32.mrf.mxu0
    %v340 = vpop.f32.mrf.mxu0
    %341 = vdwg.mxu0
    %v342 = vmax.f32 %v337, 0.0
    %v343 = vpack.c.bf16 %v342, %v342
    %v344 = vld [vmem:[%s4] sm:$0xf]
    %v345 = vld [vmem:[%s4 + $0x4] sm:$0xf]
    %v346 = vld [vmem:[%s4 + $0x8] sm:$0xf]
    %v347 = vld [vmem:[%s4 + $0xc] sm:$0xf]
    %v348 = vld [vmem:[%s4 + $0x10] sm:$0xf]
    %v349 = vld [vmem:[%s4 + $0x14] sm:$0xf]
    %v350 = vld [vmem:[%s4 + $0x18] sm:$0xf]
    %v351 = vld [vmem:[%s4 + $0x1c] sm:$0xf]
    %v352 = vld [vmem:[%s4 + $0x20] sm:$0xf]
    %v353 = vld [vmem:[%s4 + $0x24] sm:$0xf]
    %v354 = vld [vmem:[%s4 + $0x28] sm:$0xf]
    %v355 = vld [vmem:[%s4 + $0x2c] sm:$0xf]
    %v356 = vld [vmem:[%s4 + $0x30] sm:$0xf]
    %v357 = vld [vmem:[%s4 + $0x34] sm:$0xf]
    %v358 = vld [vmem:[%s4 + $0x38] sm:$0xf]
    %v359 = vld [vmem:[%s4 + $0x3c] sm:$0xf]
    %v360 = vld [vmem:[%s6] sm:$0x1]
    %v362 = vlaneseq
    %v363 = vshrl.u32 %v362, 7
    %v364 = vsub.s32 0, %v363
    %v365 = vrot.slane %v360, %v364
    %v383 = vunpack.c.l.b16 %v344
    %v384 = vunpack.c.l.b16 %v345
    %v385 = vunpack.c.l.b16 %v346
    %v386 = vunpack.c.l.b16 %v347
    %v387 = vunpack.c.l.b16 %v348
    %v388 = vunpack.c.l.b16 %v349
    %v389 = vunpack.c.l.b16 %v350
    %v390 = vunpack.c.l.b16 %v351
    %v391 = vunpack.c.l.b16 %v352
    %v392 = vunpack.c.l.b16 %v353
    %v393 = vunpack.c.l.b16 %v354
    %v394 = vunpack.c.l.b16 %v355
    %v395 = vunpack.c.l.b16 %v356
    %v396 = vunpack.c.l.b16 %v357
    %v397 = vunpack.c.l.b16 %v358
    %v398 = vunpack.c.l.b16 %v359
    %v399 = vpack.c.b16 %v384, %v383
    %v400 = vpack.c.b16 %v386, %v385
    %v401 = vpack.c.b16 %v388, %v387
    %v402 = vpack.c.b16 %v390, %v389
    %v403 = vpack.c.b16 %v392, %v391
    %v404 = vpack.c.b16 %v394, %v393
    %v405 = vpack.c.b16 %v396, %v395
    %v406 = vpack.c.b16 %v398, %v397
    %415 = vmatprep.subr.bf16.mxu0 0
    %416 = vmatpush1.bf16.msra.mxu0 %v406
    %417 = vmatprep.subr.bf16.mxu0 0
    %418 = vmatpush1.bf16.msra.mxu0 %v405
    %419 = vmatprep.subr.bf16.mxu0 0
    %420 = vmatpush1.bf16.msra.mxu0 %v404
    %421 = vmatprep.subr.bf16.mxu0 0
    %422 = vmatpush1.bf16.msra.mxu0 %v403
    %423 = vmatprep.subr.bf16.mxu0 0
    %424 = vmatpush1.bf16.msra.mxu0 %v402
    %425 = vmatprep.subr.bf16.mxu0 0
    %426 = vmatpush1.bf16.msra.mxu0 %v401
    %427 = vmatprep.subr.bf16.mxu0 0
    %428 = vmatpush1.bf16.msra.mxu0 %v400
    %429 = vmatprep.subr.bf16.mxu0 0
    %430 = vmatpush1.bf16.msra.mxu0 %v399
    %431 = vmatprep.subr.bf16.mxu0 0
    %432 = vmatpush2.bf16.msra.mxu0 0
    %433 = vmatprep.subr.bf16.mxu0 0
    %434 = vmatpush2.bf16.msra.mxu0 0
    %435 = vmatprep.subr.bf16.mxu0 0
    %436 = vmatpush2.bf16.msra.mxu0 0
    %437 = vmatprep.subr.bf16.mxu0 0
    %438 = vmatpush2.bf16.msra.mxu0 0
    %439 = vmatprep.subr.bf16.mxu0 0
    %440 = vmatpush2.bf16.msra.mxu0 0
    %441 = vmatprep.subr.bf16.mxu0 0
    %442 = vmatpush2.bf16.msra.mxu0 0
    %443 = vmatprep.subr.bf16.mxu0 0
    %444 = vmatpush2.bf16.msra.mxu0 0
    %445 = vmatprep.subr.bf16.mxu0 0
    %446 = vmatpush2.bf16.msra.mxu0 0
    %447 = vmatprep.mubr.bf16.mxu0 0
    %448 = vmatmul.mubr.bf16.gmra.mxu0 %v343
    %v449 = vpop.f32.mrf.mxu0
    %v450 = vadd.f32 %v365, %v449
    %v451 = vpop.f32.mrf.mxu0
    %v452 = vpop.f32.mrf.mxu0
    %v453 = vpop.f32.mrf.mxu0
    %454 = vdwg.mxu0
    %v455 = vxor.u32 %v450, 2147483648
    %v456 = vmul.f32 %v455, 1.442695
    %v457 = vpow.pop %v456
    %v458 = vadd.f32 %v457, 1.0
    %v459 = vrcp.pop %v458
    %v460 = vmul.f32 1.0, %v459
    %vm461 = vcmask 130048
    %462 = vst.msk [vmem:[#allocation7] sm:$0xff] %vm461, %v460
    // Predicated region
    $region38: #{tpu_custom_call.1} parent=1 // pred_check
      _
    $region39: #{tpu_custom_call.1} parent=1 // pred_check_branch
      %464 = sbr.rel (0) target = $region41
    $region40: #{tpu_custom_call.1} parent=1 // pred_region
      %s466 = ssub.s32 128, 128
      %467 = vsyncadd [#allocation4], %s466
      %s469 = sshll.u32 [#allocation7], 4
      %s470 = int_to_ptr.vmem [resolvable:$true] %s469
      %472 = dma.vmem_to_hbm [thread:$0]  %s470, 128, %s7, [#allocation4]
    $region41: #{tpu_custom_call.1} parent=1 // pred_fallthru
      _
    // Predicated region
    $region42: #{tpu_custom_call.1} parent=1 // pred_check
      _
    $region43: #{tpu_custom_call.1} parent=1 // pred_check_branch
      %474 = sbr.rel (0) target = $region45
    $region44: #{tpu_custom_call.1} parent=1 // pred_region
      %475 = dma.done [#allocation4], 128
    $region45: #{tpu_custom_call.1} parent=1 // pred_fallthru
      _
    %476 = vsyncpa [#allocation3], 1
    %477 = vsyncpa [#allocation6], 1
    %478 = vsyncpa [#allocation4], 1

</llo_original>
